<compile_context>
chip_gen: v7x
topology: tpu7x:2x2x1
jax: 0.10.0
libtpu: 0.0.40
codegen_flags: <defaults>
</compile_context>

<pallas_src>
import jax
import jax.numpy as jnp
from jax.experimental import pallas as pl
from jax.experimental.pallas import tpu as pltpu


def _round_up(x: int, m: int) -> int:
    return ((x + m - 1) // m) * m


def _vmem_capacity_bytes() -> int:
    """Per-core VMEM capacity; conservative v7x default if the query fails."""
    try:
        return int(pltpu.get_tpu_info().vmem_capacity_bytes)
    except Exception:
        return 64 * 1024 * 1024


def _choose_batch_tile(B: int, vmem_cap: int) -> tuple[int, int]:
    """Pick (tb, grid_b): >=2 grid steps when B > 16, minimal batch padding."""
    SUB = 8  # sublane multiple for the (tb, d_in) x block
    max_tb = 1024 if vmem_cap >= 96 * 1024 * 1024 else 512
    if B <= 2 * SUB:
        tb = _round_up(B, SUB)  # single step; nothing to pipeline at tiny B
    else:
        # At least 2 steps (pipelining + v7x dual-TC sharding), capped by max_tb.
        tb = min(max_tb, _round_up(pl.cdiv(B, 2), SUB))
        # Re-balance so the final tile is not mostly padding (b_pad <= B + ~7*grid_b).
        grid_b = pl.cdiv(B, tb)
        tb = _round_up(pl.cdiv(B, grid_b), SUB)
    return tb, pl.cdiv(B, tb)


def _mlp_kernel(x_ref, w1_ref, b1_ref, w2_ref, b2_ref, o_ref):
    # Cast x to the MXU dtype in-kernel (VPU cast; avoids a wrapper-side HBM
    # pass over x). No-op when compute dtype == x dtype.
    x = x_ref[...].astype(w1_ref.dtype)                               # (tb, D_in)
    # fc1 on the MXU, f32 accumulation.
    h = jnp.dot(x, w1_ref[...], preferred_element_type=jnp.float32)   # (tb, H)
    # Bias + ReLU in f32 on the VPU (safe on v5e's f32-only VPU).
    h = jnp.maximum(h + b1_ref[...], 0.0)
    # fc2 on the MXU; downcast only at the MXU boundary, accumulate f32.
    out = jnp.dot(h.astype(w2_ref.dtype), w2_ref[...],
                  preferred_element_type=jnp.float32)                 # (tb, D_out)
    # Epilogue store directly in the output dtype, unpadded columns.
    o_ref[...] = (out + b2_ref[...]).astype(o_ref.dtype)


def state_transform_mlp(x, w1, b1, w2, b2, *, compute_dtype=jnp.bfloat16):
    """relu(x @ w1 + b1) @ w2 + b2, returned in x.dtype.

    x: (B, input_dim). w1: (input_dim, hidden), b1: (1, hidden),
    w2: (hidden, out), b2: (1, out) -- ideally pre-cast via prepare_params().
    compute_dtype: MXU operand dtype (bf16 default; pass jnp.float32 for
    full-f32 matmul math at lower throughput).
    """
    B, d_in = x.shape
    hidden = w1.shape[1]
    d_out = w2.shape[1]

    # Weights should already be in compute_dtype (prepare_params); these casts
    # are no-ops in that case.
    if w1.dtype != compute_dtype:
        w1 = w1.astype(compute_dtype)
    if w2.dtype != compute_dtype:
        w2 = w2.astype(compute_dtype)
    b1 = b1.reshape(1, hidden).astype(jnp.float32)
    b2 = b2.reshape(1, d_out).astype(jnp.float32)

    vmem_cap = _vmem_capacity_bytes()
    tb, grid_b = _choose_batch_tile(B, vmem_cap)
    b_pad = grid_b * tb

    xp = x
    if b_pad != B:
        # Only the minimal (<8*grid_b rows) padding thanks to tile re-balancing.
        # Padded rows compute relu(b1)@w2+b2 garbage and are sliced off below.
        xp = jnp.pad(x, ((0, b_pad - B), (0, 0)))

    # VMEM budget from actual buffer sizes: double-buffered x/out tiles plus
    # the (pipeline-buffered) resident weights/biases, with slack for Mosaic
    # internal scratch. Clamped to 75% of physical per-core VMEM.
    x_bytes = jnp.dtype(x.dtype).itemsize
    w_bytes = jnp.dtype(compute_dtype).itemsize
    need = (2 * tb * d_in * x_bytes
            + 2 * tb * d_out * x_bytes
            + 2 * (d_in * hidden + hidden * d_out) * w_bytes
            + 2 * (hidden + d_out) * 4)
    vmem_limit = int(min(max(2 * need + (4 << 20), 16 << 20),
                         int(0.75 * vmem_cap)))

    out = pl.pallas_call(
        _mlp_kernel,
        out_shape=jax.ShapeDtypeStruct((b_pad, d_out), x.dtype),
        grid=(grid_b,),
        in_specs=[
            # x: batch-tiled (block index (i, 0)), pipelined across the grid.
            pl.BlockSpec((tb, d_in), lambda i: (i, 0)),
            # Weights / biases: constant BLOCK index (0, 0) every step ->
            # DMA'd once, VMEM-resident for the whole grid.
            pl.BlockSpec((d_in, hidden), lambda i: (0, 0)),
            pl.BlockSpec((1, hidden), lambda i: (0, 0)),
            pl.BlockSpec((hidden, d_out), lambda i: (0, 0)),
            pl.BlockSpec((1, d_out), lambda i: (0, 0)),
        ],
        out_specs=pl.BlockSpec((tb, d_out), lambda i: (i, 0)),
        compiler_params=pltpu.CompilerParams(
            dimension_semantics=("parallel",),
            vmem_limit_bytes=vmem_limit,
        ),
    )(xp, w1, b1, w2, b2)

    return out[:B] if b_pad != B else out


def init_params(key, input_dim, hidden_dim, output_dim, dtype=jnp.float32):
    """Deterministic init mimicking nn.Linear's U(-1/sqrt(fan_in), +1/sqrt(fan_in)).

    Weights are stored transposed vs torch ((in, out)) so the kernel computes
    x @ w directly.
    """
    k1, k2, k3, k4 = jax.random.split(key, 4)
    bound1 = 1.0 / (input_dim ** 0.5)
    bound2 = 1.0 / (hidden_dim ** 0.5)
    w1 = jax.random.uniform(k1, (input_dim, hidden_dim), dtype, -bound1, bound1)
    b1 = jax.random.uniform(k2, (1, hidden_dim), dtype, -bound1, bound1)
    w2 = jax.random.uniform(k3, (hidden_dim, output_dim), dtype, -bound2, bound2)
    b2 = jax.random.uniform(k4, (1, output_dim), dtype, -bound2, bound2)
    return w1, b1, w2, b2


def prepare_params(w1, b1, w2, b2, compute_dtype=jnp.bfloat16):
    """One-time cast/layout of the parameters for the kernel (cache the result;
    avoids a per-call HBM pass over the weight matrices)."""
    return (w1.astype(compute_dtype),
            b1.reshape(1, -1).astype(jnp.float32),
            w2.astype(compute_dtype),
            b2.reshape(1, -1).astype(jnp.float32))


if __name__ == "__main__":
    key = jax.random.PRNGKey(0)
    batch, input_dim, hidden_dim, output_dim = 8, 16, 32, 8

    kx, kp = jax.random.split(key)
    x = jax.random.normal(kx, (batch, input_dim), jnp.float32)
    w1, b1, w2, b2 = init_params(kp, input_dim, hidden_dim, output_dim)
    pw1, pb1, pw2, pb2 = prepare_params(w1, b1, w2, b2)  # cast once, reuse

    out = state_transform_mlp(x, pw1, pb1, pw2, pb2)
    out = jax.block_until_ready(out)
    assert out.shape == (batch, output_dim)
    assert out.dtype == x.dtype

    # Reference with the same bf16-at-MXU-boundary numerics as the kernel.
    h_ref = jnp.maximum(
        jnp.dot(x.astype(jnp.bfloat16), pw1,
                preferred_element_type=jnp.float32) + pb1, 0.0)
    ref = jnp.dot(h_ref.astype(jnp.bfloat16), pw2,
                  preferred_element_type=jnp.float32) + pb2
    assert jnp.allclose(out, ref.astype(out.dtype), atol=1e-2, rtol=1e-2)

    # Sanity vs pure-f32 math (the PyTorch module), loose tol for bf16 rounding.
    ref32 = jnp.maximum(x @ w1 + b1, 0.0) @ w2 + b2
    assert jnp.allclose(out, ref32, atol=5e-2, rtol=5e-2)

    # Exercise the multi-step (pipelined, >=2 grid steps) and ragged-batch path.
    x2 = jax.random.normal(kx, (40, input_dim), jnp.float32)
    out2 = jax.block_until_ready(state_transform_mlp(x2, pw1, pb1, pw2, pb2))
    ref2 = jnp.maximum(x2 @ w1 + b1, 0.0) @ w2 + b2
    assert out2.shape == (40, output_dim)
    assert jnp.allclose(out2, ref2, atol=5e-2, rtol=5e-2)

    print("KERNEL_OK")
</pallas_src>

<mosaic_0001>
module attributes {stable_mosaic.version = 11 : i64} {
  func.func @_mlp_kernel(%arg0: i32, %arg1: memref<8x16xf32, #tpu.memory_space<vmem>>, %arg2: memref<16x32xbf16, #tpu.memory_space<vmem>>, %arg3: memref<1x32xf32, #tpu.memory_space<vmem>>, %arg4: memref<32x8xbf16, #tpu.memory_space<vmem>>, %arg5: memref<1x8xf32, #tpu.memory_space<vmem>>, %arg6: memref<8x8xf32, #tpu.memory_space<vmem>>) attributes {dimension_semantics = [#tpu.dimension_semantics<parallel>], iteration_bounds = array<i64: 1>, scalar_prefetch = 0 : i64, scratch_operands = 0 : i64, tpu.core_type = #tpu.core_type<tc>, window_params = [{transform_indices = @transform_0, window_bounds = array<i64: 8, 16>}, {pipeline_mode = #tpu.pipeline_mode<synchronous>, transform_indices = @transform_1, window_bounds = array<i64: 16, 32>}, {pipeline_mode = #tpu.pipeline_mode<synchronous>, transform_indices = @transform_2, window_bounds = array<i64: 1, 32>}, {pipeline_mode = #tpu.pipeline_mode<synchronous>, transform_indices = @transform_3, window_bounds = array<i64: 32, 8>}, {pipeline_mode = #tpu.pipeline_mode<synchronous>, transform_indices = @transform_4, window_bounds = array<i64: 1, 8>}, {transform_indices = @transform_5, window_bounds = array<i64: 8, 8>}]} {
    %c0 = arith.constant 0 : index
    %c0_0 = arith.constant 0 : index
    %0 = vector.load %arg1[%c0, %c0_0] : memref<8x16xf32, #tpu.memory_space<vmem>>, vector<8x16xf32>
    %1 = arith.truncf %0 : vector<8x16xf32> to vector<8x16xbf16>
    %c0_1 = arith.constant 0 : index
    %c0_2 = arith.constant 0 : index
    %2 = vector.load %arg2[%c0_1, %c0_2] : memref<16x32xbf16, #tpu.memory_space<vmem>>, vector<16x32xbf16>
    %cst = arith.constant dense<0.000000e+00> : vector<8x32xf32>
    %3 = tpu.matmul %1, %2, %cst {dimension_numbers = #tpu.dot_dimension_numbers<[1], [0], [0], [1], [0, 0, 1, 1], [], []>} : vector<8x16xbf16>, vector<16x32xbf16>, vector<8x32xf32> -> vector<8x32xf32>
    %c0_3 = arith.constant 0 : index
    %c0_4 = arith.constant 0 : index
    %4 = vector.load %arg3[%c0_3, %c0_4] : memref<1x32xf32, #tpu.memory_space<vmem>>, vector<1x32xf32>
    %5 = vector.broadcast %4 : vector<1x32xf32> to vector<8x32xf32>
    %6 = arith.addf %3, %5 : vector<8x32xf32>
    %cst_5 = arith.constant 0.000000e+00 : f32
    %7 = vector.broadcast %cst_5 : f32 to vector<8x32xf32>
    %8 = arith.maximumf %6, %7 : vector<8x32xf32>
    %9 = arith.truncf %8 : vector<8x32xf32> to vector<8x32xbf16>
    %c0_6 = arith.constant 0 : index
    %c0_7 = arith.constant 0 : index
    %10 = vector.load %arg4[%c0_6, %c0_7] : memref<32x8xbf16, #tpu.memory_space<vmem>>, vector<32x8xbf16>
    %cst_8 = arith.constant dense<0.000000e+00> : vector<8x8xf32>
    %11 = tpu.matmul %9, %10, %cst_8 {dimension_numbers = #tpu.dot_dimension_numbers<[1], [0], [0], [1], [0, 0, 1, 1], [], []>} : vector<8x32xbf16>, vector<32x8xbf16>, vector<8x8xf32> -> vector<8x8xf32>
    %c0_9 = arith.constant 0 : index
    %c0_10 = arith.constant 0 : index
    %12 = vector.load %arg5[%c0_9, %c0_10] : memref<1x8xf32, #tpu.memory_space<vmem>>, vector<1x8xf32>
    %13 = vector.broadcast %12 : vector<1x8xf32> to vector<8x8xf32>
    %14 = arith.addf %11, %13 : vector<8x8xf32>
    %c0_11 = arith.constant 0 : index
    %c0_12 = arith.constant 0 : index
    %15 = vector.load %arg6[%c0_11, %c0_12] : memref<8x8xf32, #tpu.memory_space<vmem>>, vector<8x8xf32>
    tpu.vector_store %arg6[%c0_11, %c0_12], %14 {strides = array<i32>} : memref<8x8xf32, #tpu.memory_space<vmem>>, vector<8x8xf32>,
    return
  }
  func.func @transform_0(%arg0: i32) -> (i32, i32) {
    %c0_i32 = arith.constant 0 : i32
    %c0_i32_0 = arith.constant 0 : i32
    return %arg0, %c0_i32 : i32, i32
  }
  func.func @transform_1(%arg0: i32) -> (i32, i32) {
    %c0_i32 = arith.constant 0 : i32
    %c0_i32_0 = arith.constant 0 : i32
    %c0_i32_1 = arith.constant 0 : i32
    return %c0_i32, %c0_i32_0 : i32, i32
  }
  func.func @transform_2(%arg0: i32) -> (i32, i32) {
    %c0_i32 = arith.constant 0 : i32
    %c0_i32_0 = arith.constant 0 : i32
    %c0_i32_1 = arith.constant 0 : i32
    return %c0_i32, %c0_i32_0 : i32, i32
  }
  func.func @transform_3(%arg0: i32) -> (i32, i32) {
    %c0_i32 = arith.constant 0 : i32
    %c0_i32_0 = arith.constant 0 : i32
    %c0_i32_1 = arith.constant 0 : i32
    return %c0_i32, %c0_i32_0 : i32, i32
  }
  func.func @transform_4(%arg0: i32) -> (i32, i32) {
    %c0_i32 = arith.constant 0 : i32
    %c0_i32_0 = arith.constant 0 : i32
    %c0_i32_1 = arith.constant 0 : i32
    return %c0_i32, %c0_i32_0 : i32, i32
  }
  func.func @transform_5(%arg0: i32) -> (i32, i32) {
    %c0_i32 = arith.constant 0 : i32
    %c0_i32_0 = arith.constant 0 : i32
    return %arg0, %c0_i32 : i32, i32
  }
}

</mosaic_0001>

<llo_original>
// kernel: tpu_custom_call.1
$region0: #{tpu_custom_call.1}
  #allocation0 [shape = 'u32[]', space=smem, size = 0x4, offset = 0x4, fixed_abs, tag = 'smem constant byte address 0x4 - core index']
  #allocation1 [shape = 'u32[144,128]{1,0:T(1,128)}', space=vmem, size = 0x12000, scoped, tag = 'internal scratch']
  %s0 = inlined_call_operand.vmem [shape: f32[8,16], index: 0, kind: input, shape index: {}]
  %s1 = inlined_call_operand.vmem [shape: bf16[16,32], index: 1, kind: input, shape index: {}]
  %s2 = inlined_call_operand.vmem [shape: f32[1,32], index: 2, kind: input, shape index: {}]
  %s3 = inlined_call_operand.vmem [shape: bf16[32,8], index: 3, kind: input, shape index: {}]
  %s4 = inlined_call_operand.vmem [shape: f32[1,8], index: 4, kind: input, shape index: {}]
  %s5 = inlined_call_operand.hbm [shape: f32[8,8], index: 5, kind: output, shape index: {}]
  %s6 = sld [smem:[#allocation0]]
  $region30: #{tpu_custom_call.1} parent=0
    _
  %s8 = ssub.s32 1, %s6
  %s9 = scalar_select 0, %s8, %s6
  $region1: #{tpu_custom_call.1} parent=0
    #allocation2 [shape = 'u8[4096]{0}', space=vmem, size = 0x1000, scoped, tag = 'output window, operand 0, single buffered']
    #allocation3 [shape = 's32[1]{0}', space=sflag, size = 0x4, scoped, tag = 'scoped memory for tpu_custom_call.1']
    %10 = vsyncpa [#allocation3], 0
    // Predicated region
    $region2: #{tpu_custom_call.1} parent=1 // pred_check
      _
    $region3: #{tpu_custom_call.1} parent=1 // pred_check_branch
      %12 = sbr.rel (0) target = $region5
    $region4: #{tpu_custom_call.1} parent=1 // pred_region
      _
    $region5: #{tpu_custom_call.1} parent=1 // pred_fallthru
      _
    // Predicated region
    $region6: #{tpu_custom_call.1} parent=1 // pred_check
      _
    $region7: #{tpu_custom_call.1} parent=1 // pred_check_branch
      %14 = sbr.rel (0) target = $region9
    $region8: #{tpu_custom_call.1} parent=1 // pred_region
      _
    $region9: #{tpu_custom_call.1} parent=1 // pred_fallthru
      _
    // Predicated region
    $region10: #{tpu_custom_call.1} parent=1 // pred_check
      _
    $region11: #{tpu_custom_call.1} parent=1 // pred_check_branch
      %16 = sbr.rel (0) target = $region13
    $region12: #{tpu_custom_call.1} parent=1 // pred_region
      _
    $region13: #{tpu_custom_call.1} parent=1 // pred_fallthru
      _
    // Predicated region
    $region14: #{tpu_custom_call.1} parent=1 // pred_check
      _
    $region15: #{tpu_custom_call.1} parent=1 // pred_check_branch
      %18 = sbr.rel (0) target = $region17
    $region16: #{tpu_custom_call.1} parent=1 // pred_region
      _
    $region17: #{tpu_custom_call.1} parent=1 // pred_fallthru
      _
    // Predicated region
    $region18: #{tpu_custom_call.1} parent=1 // pred_check
      _
    $region19: #{tpu_custom_call.1} parent=1 // pred_check_branch
      %20 = sbr.rel (0) target = $region21
    $region20: #{tpu_custom_call.1} parent=1 // pred_region
      _
    $region21: #{tpu_custom_call.1} parent=1 // pred_fallthru
      _
    %v22 = vld [vmem:[%s0] sm:$0xff]
    %v23 = vpack.c.bf16 %v22, %v22
    %v24 = vld [vmem:[%s1] sm:$0xf]
    %v25 = vld [vmem:[%s1 + $0x4] sm:$0xf]
    %v26 = vld [vmem:[%s2] sm:$0x1]
    %v28 = vlaneseq
    %v29 = vshrl.u32 %v28, 7
    %v30 = vsub.s32 0, %v29
    %v31 = vrot.slane %v26, %v30
    %v35 = vunpack.c.l.b16 %v24
    %v36 = vunpack.c.l.b16 %v25
    %v37 = vpack.c.b16 %v36, %v35
    %vm39 = vcmask 130048
    %v41 = vsel %vm39, %v23, 0
    %43 = vmatprep.subr.bf16.mxu0 0
    %44 = vmatpush1.bf16.msra.mxu0 %v37
    %45 = vmatprep.subr.bf16.mxu0 0
    %46 = vmatpush1.bf16.msra.mxu0 0
    %47 = vmatprep.subr.bf16.mxu0 0
    %48 = vmatpush1.bf16.msra.mxu0 0
    %49 = vmatprep.subr.bf16.mxu0 0
    %50 = vmatpush1.bf16.msra.mxu0 0
    %51 = vmatprep.subr.bf16.mxu0 0
    %52 = vmatpush1.bf16.msra.mxu0 0
    %53 = vmatprep.subr.bf16.mxu0 0
    %54 = vmatpush1.bf16.msra.mxu0 0
    %55 = vmatprep.subr.bf16.mxu0 0
    %56 = vmatpush1.bf16.msra.mxu0 0
    %57 = vmatprep.subr.bf16.mxu0 0
    %58 = vmatpush1.bf16.msra.mxu0 0
    %59 = vmatprep.subr.bf16.mxu0 0
    %60 = vmatpush1.bf16.msra.mxu0 0
    %61 = vmatprep.subr.bf16.mxu0 0
    %62 = vmatpush1.bf16.msra.mxu0 0
    %63 = vmatprep.subr.bf16.mxu0 0
    %64 = vmatpush1.bf16.msra.mxu0 0
    %65 = vmatprep.subr.bf16.mxu0 0
    %66 = vmatpush1.bf16.msra.mxu0 0
    %67 = vmatprep.subr.bf16.mxu0 0
    %68 = vmatpush1.bf16.msra.mxu0 0
    %69 = vmatprep.subr.bf16.mxu0 0
    %70 = vmatpush1.bf16.msra.mxu0 0
    %71 = vmatprep.subr.bf16.mxu0 0
    %72 = vmatpush1.bf16.msra.mxu0 0
    %73 = vmatprep.subr.bf16.mxu0 0
    %74 = vmatpush1.bf16.msra.mxu0 0
    %75 = vmatprep.mubr.bf16.mxu0 0
    %76 = vmatmul.mubr.bf16.gmra.mrb[0].mxu0 %v41
    %v77 = vpop.f32.mrb[0].mxu0
    %v78 = vadd.f32 %v31, %v77
    %v79 = vpop.f32.mrb[0].mxu0
    %v80 = vpop.f32.mrb[0].mxu0
    %v81 = vpop.f32.mrb[0].mxu0
    %82 = vdwg.mxu0
    %v83 = vmax.f32 %v78, 0.0
    %v84 = vpack.c.bf16 %v83, %v83
    %v85 = vld [vmem:[%s3] sm:$0xf]
    %v86 = vld [vmem:[%s3 + $0x4] sm:$0xf]
    %v87 = vld [vmem:[%s3 + $0x8] sm:$0xf]
    %v88 = vld [vmem:[%s3 + $0xc] sm:$0xf]
    %v89 = vld [vmem:[%s4] sm:$0x1]
    %v91 = vlaneseq
    %v92 = vshrl.u32 %v91, 7
    %v93 = vsub.s32 0, %v92
    %v94 = vrot.slane %v89, %v93
    %v100 = vunpack.c.l.b16 %v85
    %v101 = vunpack.c.l.b16 %v86
    %v102 = vunpack.c.l.b16 %v87
    %v103 = vunpack.c.l.b16 %v88
    %v104 = vpack.c.b16 %v101, %v100
    %v105 = vpack.c.b16 %v103, %v102
    %vm108 = vcmask 261120
    %v110 = vsel %vm108, %v84, 0
    %112 = vmatprep.subr.bf16.mxu0 0
    %113 = vmatpush1.bf16.msra.mxu0 %v104
    %114 = vmatprep.subr.bf16.mxu0 0
    %115 = vmatpush1.bf16.msra.mxu0 %v105
    %116 = vmatprep.subr.bf16.mxu0 0
    %117 = vmatpush1.bf16.msra.mxu0 0
    %118 = vmatprep.subr.bf16.mxu0 0
    %119 = vmatpush1.bf16.msra.mxu0 0
    %120 = vmatprep.subr.bf16.mxu0 0
    %121 = vmatpush1.bf16.msra.mxu0 0
    %122 = vmatprep.subr.bf16.mxu0 0
    %123 = vmatpush1.bf16.msra.mxu0 0
    %124 = vmatprep.subr.bf16.mxu0 0
    %125 = vmatpush1.bf16.msra.mxu0 0
    %126 = vmatprep.subr.bf16.mxu0 0
    %127 = vmatpush1.bf16.msra.mxu0 0
    %128 = vmatprep.subr.bf16.mxu0 0
    %129 = vmatpush1.bf16.msra.mxu0 0
    %130 = vmatprep.subr.bf16.mxu0 0
    %131 = vmatpush1.bf16.msra.mxu0 0
    %132 = vmatprep.subr.bf16.mxu0 0
    %133 = vmatpush1.bf16.msra.mxu0 0
    %134 = vmatprep.subr.bf16.mxu0 0
    %135 = vmatpush1.bf16.msra.mxu0 0
    %136 = vmatprep.subr.bf16.mxu0 0
    %137 = vmatpush1.bf16.msra.mxu0 0
    %138 = vmatprep.subr.bf16.mxu0 0
    %139 = vmatpush1.bf16.msra.mxu0 0
    %140 = vmatprep.subr.bf16.mxu0 0
    %141 = vmatpush1.bf16.msra.mxu0 0
    %142 = vmatprep.subr.bf16.mxu0 0
    %143 = vmatpush1.bf16.msra.mxu0 0
    %144 = vmatprep.mubr.bf16.mxu0 0
    %145 = vmatmul.mubr.bf16.gmra.mrb[0].mxu0 %v110
    %v146 = vpop.f32.mrb[0].mxu0
    %v147 = vadd.f32 %v94, %v146
    %v148 = vpop.f32.mrb[0].mxu0
    %v149 = vpop.f32.mrb[0].mxu0
    %v150 = vpop.f32.mrb[0].mxu0
    %151 = vdwg.mxu0
    %vm152 = vcmask 64512
    %153 = vst.msk [vmem:[#allocation2] sm:$0xff] %vm152, %v147
    // Predicated region
    $region22: #{tpu_custom_call.1} parent=1 // pred_check
      _
    $region23: #{tpu_custom_call.1} parent=1 // pred_check_branch
      %155 = sbr.rel (0) target = $region25
    $region24: #{tpu_custom_call.1} parent=1 // pred_region
      %s157 = ssub.s32 128, 128
      %158 = vsyncadd [#allocation3], %s157
      %s160 = sshll.u32 [#allocation2], 4
      %s161 = int_to_ptr.vmem [resolvable:$true] %s160
      %163 = dma.vmem_to_hbm [thread:$0]  %s161, 128, %s5, [#allocation3]
    $region25: #{tpu_custom_call.1} parent=1 // pred_fallthru
      _
    // Predicated region
    $region26: #{tpu_custom_call.1} parent=1 // pred_check
      _
    $region27: #{tpu_custom_call.1} parent=1 // pred_check_branch
      %165 = sbr.rel (0) target = $region29
    $region28: #{tpu_custom_call.1} parent=1 // pred_region
      %166 = dma.done [#allocation3], 128
    $region29: #{tpu_custom_call.1} parent=1 // pred_fallthru
      _
    %167 = vsyncpa [#allocation3], 1

</llo_original>
